<compile_context>
chip_gen: v7x
topology: tpu7x:2x2x1
jax: 0.10.0
libtpu: 0.0.40
codegen_flags: <defaults>
</compile_context>

<pallas_src>
import jax
import jax.numpy as jnp
from jax import lax
from jax.experimental import pallas as pl
from jax.experimental.pallas import tpu as pltpu


def _round_up(n, m):
    return ((n + m - 1) // m) * m


def _linear_kernel(x_ref, w_ref, b_ref, o_ref):
    # x_ref : (TB, IN)   VMEM  (batch tile, IN=10 on the padded lane axis)
    # w_ref : (OUT, IN)  VMEM  (PyTorch layout, consumed as-is; VMEM-resident)
    # b_ref : (OUT, 1)   VMEM  (broadcasts along the lane/batch axis)
    # o_ref : (OUT, TB)  VMEM  (batch on the 128-lane axis -> lane-dense vst)
    #
    # yT = W @ x.T : contract dim 1 (IN) of both operands.  Batch sits on the
    # MXU N/lane axis; W is the plain LHS (no per-step reshuffle of the 5x10
    # weight), and the output tile is lane-dense.
    yt = lax.dot_general(
        w_ref[...], x_ref[...],
        dimension_numbers=(((1,), (1,)), ((), ())),
        preferred_element_type=jnp.float32,
    )
    o_ref[...] = (yt + b_ref[...]).astype(o_ref.dtype)


def toy_model_forward(x, weight, bias, *, tb_max=4096):
    """y = x @ weight.T + bias   (semantics of nn.Linear(10, 5)).

    weight is PyTorch-layout [out_features, in_features]; it is consumed in
    place by the kernel (no wrapper-side transpose of the weight).
    """
    B, IN = x.shape
    OUT, IN2 = weight.shape
    assert IN == IN2
    b2 = bias.reshape(OUT, 1)   # column vector -> broadcasts over batch lanes

    # Batch tile selection:
    #  * B <= tb_max: a single block (grid=(1,)) -- no pipelining machinery,
    #    no per-step overhead, block dims equal the full array dims so the
    #    (8,128) constraint is satisfied trivially.
    #  * B >  tb_max: big multiple-of-128 tiles (lane-dense output stores),
    #    capped so there are at least 2 grid steps -> the "parallel" batch
    #    axis can shard across v7x's 2 TensorCores.
    if B <= tb_max:
        TB = B
    else:
        TB = min(tb_max, _round_up(pl.cdiv(B, 2), 128))
    grid = (pl.cdiv(B, TB),)

    yt = pl.pallas_call(
        _linear_kernel,
        out_shape=jax.ShapeDtypeStruct((OUT, B), x.dtype),
        grid=grid,
        in_specs=[
            pl.BlockSpec((TB, IN), lambda i: (i, 0)),    # x: tiled over batch
            pl.BlockSpec((OUT, IN), lambda i: (0, 0)),   # weight: VMEM-resident
            pl.BlockSpec((OUT, 1), lambda i: (0, 0)),    # bias:   VMEM-resident
        ],
        out_specs=pl.BlockSpec((OUT, TB), lambda i: (0, i)),
        compiler_params=pltpu.CompilerParams(
            dimension_semantics=("parallel",),           # megacore-shardable
        ),
    )(x, weight, b2)

    # Restore the public nn.Linear layout [B, OUT] (tiny (OUT, B) transpose).
    return yt.T


if __name__ == "__main__":
    IN_FEATURES = 10
    OUT_FEATURES = 5
    BATCH = 8

    key = jax.random.PRNGKey(0)
    k_x, k_w, k_b, k_x2 = jax.random.split(key, 4)

    # Deterministic parameter init (mimics nn.Linear's uniform(-1/sqrt(in), 1/sqrt(in)))
    bound = 1.0 / (IN_FEATURES ** 0.5)
    weight = jax.random.uniform(
        k_w, (OUT_FEATURES, IN_FEATURES), jnp.float32, -bound, bound)
    bias = jax.random.uniform(
        k_b, (OUT_FEATURES,), jnp.float32, -bound, bound)

    # --- ToyModel-sized case (B=8): single block, no pipelining overhead ---
    x = jax.random.normal(k_x, (BATCH, IN_FEATURES), jnp.float32)
    y = jax.block_until_ready(toy_model_forward(x, weight, bias))

    y_ref = jnp.matmul(x, weight.T, precision=lax.Precision.HIGHEST) + bias
    assert y.shape == (BATCH, OUT_FEATURES)
    assert jnp.allclose(y, y_ref, atol=1e-4, rtol=1e-4)

    # --- large-batch case: multi-step batch grid (TB=4096, grid=(3,)) with a
    #     partial tail block and the lane-dense [OUT, TB] output orientation ---
    BIG = 9000
    x_big = jax.random.normal(k_x2, (BIG, IN_FEATURES), jnp.float32)
    y_big = jax.block_until_ready(toy_model_forward(x_big, weight, bias))

    y_big_ref = jnp.matmul(x_big, weight.T, precision=lax.Precision.HIGHEST) + bias
    assert y_big.shape == (BIG, OUT_FEATURES)
    assert jnp.allclose(y_big, y_big_ref, atol=1e-4, rtol=1e-4)

    print("KERNEL_OK")
</pallas_src>

<mosaic_0001>
module attributes {stable_mosaic.version = 11 : i64} {
  func.func @_linear_kernel(%arg0: i32, %arg1: memref<8x10xf32, #tpu.memory_space<vmem>>, %arg2: memref<5x10xf32, #tpu.memory_space<vmem>>, %arg3: memref<5x1xf32, #tpu.memory_space<vmem>>, %arg4: memref<5x8xf32, #tpu.memory_space<vmem>>) attributes {dimension_semantics = [#tpu.dimension_semantics<parallel>], iteration_bounds = array<i64: 1>, scalar_prefetch = 0 : i64, scratch_operands = 0 : i64, tpu.core_type = #tpu.core_type<tc>, window_params = [{transform_indices = @transform_0, window_bounds = array<i64: 8, 10>}, {pipeline_mode = #tpu.pipeline_mode<synchronous>, transform_indices = @transform_1, window_bounds = array<i64: 5, 10>}, {pipeline_mode = #tpu.pipeline_mode<synchronous>, transform_indices = @transform_2, window_bounds = array<i64: 5, 1>}, {transform_indices = @transform_3, window_bounds = array<i64: 5, 8>}]} {
    %c0 = arith.constant 0 : index
    %c0_0 = arith.constant 0 : index
    %0 = vector.load %arg2[%c0, %c0_0] : memref<5x10xf32, #tpu.memory_space<vmem>>, vector<5x10xf32>
    %c0_1 = arith.constant 0 : index
    %c0_2 = arith.constant 0 : index
    %1 = vector.load %arg1[%c0_1, %c0_2] : memref<8x10xf32, #tpu.memory_space<vmem>>, vector<8x10xf32>
    %cst = arith.constant dense<0.000000e+00> : vector<5x8xf32>
    %2 = tpu.matmul %0, %1, %cst {dimension_numbers = #tpu.dot_dimension_numbers<[1], [1], [0], [0], [0, 0, 1, 0], [], []>} : vector<5x10xf32>, vector<8x10xf32>, vector<5x8xf32> -> vector<5x8xf32>
    %c0_3 = arith.constant 0 : index
    %c0_4 = arith.constant 0 : index
    %3 = vector.load %arg3[%c0_3, %c0_4] : memref<5x1xf32, #tpu.memory_space<vmem>>, vector<5x1xf32>
    %4 = vector.broadcast %3 : vector<5x1xf32> to vector<5x8xf32>
    %5 = arith.addf %2, %4 : vector<5x8xf32>
    %c0_5 = arith.constant 0 : index
    %c0_6 = arith.constant 0 : index
    %6 = vector.load %arg4[%c0_5, %c0_6] : memref<5x8xf32, #tpu.memory_space<vmem>>, vector<5x8xf32>
    tpu.vector_store %arg4[%c0_5, %c0_6], %5 {strides = array<i32>} : memref<5x8xf32, #tpu.memory_space<vmem>>, vector<5x8xf32>,
    return
  }
  func.func @transform_0(%arg0: i32) -> (i32, i32) {
    %c0_i32 = arith.constant 0 : i32
    %c0_i32_0 = arith.constant 0 : i32
    return %arg0, %c0_i32 : i32, i32
  }
  func.func @transform_1(%arg0: i32) -> (i32, i32) {
    %c0_i32 = arith.constant 0 : i32
    %c0_i32_0 = arith.constant 0 : i32
    %c0_i32_1 = arith.constant 0 : i32
    return %c0_i32, %c0_i32_0 : i32, i32
  }
  func.func @transform_2(%arg0: i32) -> (i32, i32) {
    %c0_i32 = arith.constant 0 : i32
    %c0_i32_0 = arith.constant 0 : i32
    %c0_i32_1 = arith.constant 0 : i32
    return %c0_i32, %c0_i32_0 : i32, i32
  }
  func.func @transform_3(%arg0: i32) -> (i32, i32) {
    %c0_i32 = arith.constant 0 : i32
    %c0_i32_0 = arith.constant 0 : i32
    return %c0_i32, %arg0 : i32, i32
  }
}

</mosaic_0001>

<llo_original>
// kernel: tpu_custom_call.1
$region0: #{tpu_custom_call.1}
  #allocation0 [shape = 'u32[]', space=smem, size = 0x4, offset = 0x4, fixed_abs, tag = 'smem constant byte address 0x4 - core index']
  #allocation1 [shape = 'u32[144,128]{1,0:T(1,128)}', space=vmem, size = 0x12000, scoped, tag = 'internal scratch']
  %s0 = inlined_call_operand.vmem [shape: f32[8,10], index: 0, kind: input, shape index: {}]
  %s1 = inlined_call_operand.hbm [shape: f32[5,10], index: 1, kind: input, shape index: {}]
  %s2 = inlined_call_operand.vmem [shape: f32[5,1], index: 2, kind: input, shape index: {}]
  %s3 = inlined_call_operand.hbm [shape: f32[5,8], index: 3, kind: output, shape index: {}]
  %s4 = sld [smem:[#allocation0]]
  $region26: #{tpu_custom_call.1} parent=0
    _
  %s6 = ssub.s32 1, %s4
  %s7 = scalar_select 0, %s6, %s4
  $region1: #{tpu_custom_call.1} parent=0
    #allocation2 [shape = 'u8[4096]{0}', space=vmem, size = 0x1000, scoped, tag = 'input window, operand 1, single buffered']
    #allocation3 [shape = 's32[1]{0}', space=sflag, size = 0x4, scoped, tag = 'scoped memory for tpu_custom_call.1']
    #allocation4 [shape = 's32[1]{0}', space=sflag, size = 0x4, scoped, tag = 'scoped memory for tpu_custom_call.1']
    #allocation5 [shape = 'u8[4096]{0}', space=vmem, size = 0x1000, scoped, tag = 'output window, operand 0, single buffered']
    %8 = vsyncpa [#allocation3], 0
    %9 = vsyncpa [#allocation4], 0
    // Predicated region
    $region2: #{tpu_custom_call.1} parent=1 // pred_check
      _
    $region3: #{tpu_custom_call.1} parent=1 // pred_check_branch
      %11 = sbr.rel (0) target = $region5
    $region4: #{tpu_custom_call.1} parent=1 // pred_region
      _
    $region5: #{tpu_custom_call.1} parent=1 // pred_fallthru
      _
    // Predicated region
    $region6: #{tpu_custom_call.1} parent=1 // pred_check
      _
    $region7: #{tpu_custom_call.1} parent=1 // pred_check_branch
      %13 = sbr.rel (0) target = $region9
    $region8: #{tpu_custom_call.1} parent=1 // pred_region
      %s15 = ssub.s32 128, 128
      %16 = vsyncadd [#allocation3], %s15
      %s18 = sshll.u32 [#allocation2], 4
      %s19 = int_to_ptr.vmem [resolvable:$true] %s18
      %21 = dma.hbm_to_vmem [thread:$0]  %s1, 128, %s19, [#allocation3]
    $region9: #{tpu_custom_call.1} parent=1 // pred_fallthru
      _
    // Predicated region
    $region10: #{tpu_custom_call.1} parent=1 // pred_check
      _
    $region11: #{tpu_custom_call.1} parent=1 // pred_check_branch
      %23 = sbr.rel (0) target = $region13
    $region12: #{tpu_custom_call.1} parent=1 // pred_region
      _
    $region13: #{tpu_custom_call.1} parent=1 // pred_fallthru
      _
    // Predicated region
    $region14: #{tpu_custom_call.1} parent=1 // pred_check
      _
    $region15: #{tpu_custom_call.1} parent=1 // pred_check_branch
      %25 = sbr.rel (0) target = $region17
    $region16: #{tpu_custom_call.1} parent=1 // pred_region
      %26 = dma.done [#allocation3], 128
    $region17: #{tpu_custom_call.1} parent=1 // pred_fallthru
      _
    %v27 = vld [vmem:[#allocation2] sm:$0x1f]
    %v28 = vld [vmem:[%s0] sm:$0xff]
    %v29 = vld [vmem:[%s2] sm:$0x1f]
    %31 = vset.pattern.permute.xlu0 0
    %32 = vperm.xlu0 %31, %v29
    %v33 = vpop.permute.xlu0 %32
    %vm35 = vcmask 80896
    %v37 = vsel %vm35, %v27, 0
    %v40 = vsel %vm35, %v28, 0
    %42 = vmatprep.subr.mxu0 0.0
    %43 = vmatpush1.xpose.msra.mxu0 %v40
    %44 = vmatprep.subr.mxu0 0.0
    %45 = vmatpush1.xpose.msra.mxu0 0.0
    %46 = vmatprep.subr.mxu0 0.0
    %47 = vmatpush1.xpose.msra.mxu0 0.0
    %48 = vmatprep.subr.mxu0 0.0
    %49 = vmatpush1.xpose.msra.mxu0 0.0
    %50 = vmatprep.subr.mxu0 0.0
    %51 = vmatpush1.xpose.msra.mxu0 0.0
    %52 = vmatprep.subr.mxu0 0.0
    %53 = vmatpush1.xpose.msra.mxu0 0.0
    %54 = vmatprep.subr.mxu0 0.0
    %55 = vmatpush1.xpose.msra.mxu0 0.0
    %56 = vmatprep.subr.mxu0 0.0
    %57 = vmatpush1.xpose.msra.mxu0 0.0
    %58 = vmatprep.subr.mxu0 0.0
    %59 = vmatpush1.xpose.msra.mxu0 0.0
    %60 = vmatprep.subr.mxu0 0.0
    %61 = vmatpush1.xpose.msra.mxu0 0.0
    %62 = vmatprep.subr.mxu0 0.0
    %63 = vmatpush1.xpose.msra.mxu0 0.0
    %64 = vmatprep.subr.mxu0 0.0
    %65 = vmatpush1.xpose.msra.mxu0 0.0
    %66 = vmatprep.subr.mxu0 0.0
    %67 = vmatpush1.xpose.msra.mxu0 0.0
    %68 = vmatprep.subr.mxu0 0.0
    %69 = vmatpush1.xpose.msra.mxu0 0.0
    %70 = vmatprep.subr.mxu0 0.0
    %71 = vmatpush1.xpose.msra.mxu0 0.0
    %72 = vmatprep.subr.mxu0 0.0
    %73 = vmatpush1.xpose.msra.mxu0 0.0
    %74 = vmatprep.subr.mxu0 0.0
    %75 = vmatpush1.xpose.msra.mxu0 0.0
    %76 = vmatprep.subr.mxu0 0.0
    %77 = vmatpush1.xpose.msra.mxu0 0.0
    %78 = vmatprep.subr.mxu0 0.0
    %79 = vmatpush1.xpose.msra.mxu0 0.0
    %80 = vmatprep.subr.mxu0 0.0
    %81 = vmatpush1.xpose.msra.mxu0 0.0
    %82 = vmatprep.subr.mxu0 0.0
    %83 = vmatpush1.xpose.msra.mxu0 0.0
    %84 = vmatprep.subr.mxu0 0.0
    %85 = vmatpush1.xpose.msra.mxu0 0.0
    %86 = vmatprep.subr.mxu0 0.0
    %87 = vmatpush1.xpose.msra.mxu0 0.0
    %88 = vmatprep.subr.mxu0 0.0
    %89 = vmatpush1.xpose.msra.mxu0 0.0
    %90 = vmatprep.subr.mxu0 0.0
    %91 = vmatpush1.xpose.msra.mxu0 0.0
    %92 = vmatprep.subr.mxu0 0.0
    %93 = vmatpush1.xpose.msra.mxu0 0.0
    %94 = vmatprep.subr.mxu0 0.0
    %95 = vmatpush1.xpose.msra.mxu0 0.0
    %96 = vmatprep.subr.mxu0 0.0
    %97 = vmatpush1.xpose.msra.mxu0 0.0
    %98 = vmatprep.subr.mxu0 0.0
    %99 = vmatpush1.xpose.msra.mxu0 0.0
    %100 = vmatprep.subr.mxu0 0.0
    %101 = vmatpush1.xpose.msra.mxu0 0.0
    %102 = vmatprep.subr.mxu0 0.0
    %103 = vmatpush1.xpose.msra.mxu0 0.0
    %104 = vmatprep.subr.mxu0 0.0
    %105 = vmatpush1.xpose.msra.mxu0 0.0
    %106 = vmatprep.mubr.f32.mxu0 0.0
    %107 = vmatmul.mubr.f32.gmra.mrb[0].mxu0 %v37
    %v108 = vpop.f32.mrb[0].mxu0
    %v109 = vadd.f32 %v33, %v108
    %v110 = vpop.f32.mrb[0].mxu0
    %111 = vdwg.mxu0
    %vm112 = vcmask 61440
    %113 = vst.msk [vmem:[#allocation5] sm:$0x1f] %vm112, %v109
    // Predicated region
    $region18: #{tpu_custom_call.1} parent=1 // pred_check
      _
    $region19: #{tpu_custom_call.1} parent=1 // pred_check_branch
      %115 = sbr.rel (0) target = $region21
    $region20: #{tpu_custom_call.1} parent=1 // pred_region
      %s117 = ssub.s32 128, 128
      %118 = vsyncadd [#allocation4], %s117
      %s120 = sshll.u32 [#allocation5], 4
      %s121 = int_to_ptr.vmem [resolvable:$true] %s120
      %123 = dma.vmem_to_hbm [thread:$0]  %s121, 128, %s3, [#allocation4]
    $region21: #{tpu_custom_call.1} parent=1 // pred_fallthru
      _
    // Predicated region
    $region22: #{tpu_custom_call.1} parent=1 // pred_check
      _
    $region23: #{tpu_custom_call.1} parent=1 // pred_check_branch
      %125 = sbr.rel (0) target = $region25
    $region24: #{tpu_custom_call.1} parent=1 // pred_region
      %126 = dma.done [#allocation4], 128
    $region25: #{tpu_custom_call.1} parent=1 // pred_fallthru
      _
    %127 = vsyncpa [#allocation3], 1
    %128 = vsyncpa [#allocation4], 1

</llo_original>
